<compile_context>
chip_gen: v5e
topology: v5e:2x2
jax: 0.10.0
libtpu: 0.0.40
codegen_flags: <defaults>
</compile_context>

<pallas_src>
import math
import functools

import jax
import jax.numpy as jnp
from jax import lax
from jax.experimental import pallas as pl
from jax.experimental.pallas import tpu as pltpu


def _mha_kernel(x_ref, wqkv_ref, bqkv_ref, wo_ref, bo_ref,
                out_ref, probs_ref=None, *, num_heads, head_size):
    """One grid step = one batch element.

    x_ref     : (1, T, H)
    wqkv_ref  : (H, 3*num_heads*Dh)   -- [Q heads | K heads | V heads], Q pre-scaled
    bqkv_ref  : (1, 3*num_heads*Dh)
    wo_ref    : (all_head_size, H)
    bo_ref    : (1, H)
    out_ref   : (1, T, H)
    probs_ref : (1, T, num_heads*T) or None
    """
    x = x_ref[0]                                   # (T, H)
    T = x.shape[0]
    Dh = head_size
    NHd = num_heads * Dh
    H_out = wo_ref.shape[1]

    # Single fused QKV projection: one MXU push instead of 3*num_heads tiny ones.
    qkv = jnp.dot(x, wqkv_ref[...],
                  preferred_element_type=jnp.float32) + bqkv_ref[...]   # (T, 3*NHd)

    acc = jnp.zeros((T, H_out), jnp.float32)
    for h in range(num_heads):                     # static unroll over heads
        q = qkv[:, h * Dh:(h + 1) * Dh]                          # (T, Dh), scaled
        k = qkv[:, NHd + h * Dh:NHd + (h + 1) * Dh]              # (T, Dh)
        v = qkv[:, 2 * NHd + h * Dh:2 * NHd + (h + 1) * Dh]      # (T, Dh)

        # Contract last dims directly (no explicit k.T transpose).
        scores = lax.dot_general(
            q, k, (((1,), (1,)), ((), ())),
            preferred_element_type=jnp.float32)                  # (T, T)

        m = jnp.max(scores, axis=-1, keepdims=True)
        e = jnp.exp(scores - m)
        s = jnp.sum(e, axis=-1, keepdims=True)
        probs = e * pl.reciprocal(s, approx=False)               # exact softmax
        # attention dropout: eval mode -> identity

        if probs_ref is not None:
            # Lane-dense probs output: head h occupies lanes [h*T, (h+1)*T).
            probs_ref[0, :, h * T:(h + 1) * T] = probs

        ctx = jnp.dot(probs, v, preferred_element_type=jnp.float32)   # (T, Dh)
        # Fold output projection into the head loop (static ref slice is free).
        acc = acc + jnp.dot(ctx, wo_ref[h * Dh:(h + 1) * Dh, :],
                            preferred_element_type=jnp.float32)

    # output dropout: eval mode -> identity
    out_ref[0] = acc + bo_ref[...]


def multi_head_attention(x, params, *, num_heads, output_attentions=False):
    """x: (B, T, H) float32.  Returns (attention_output, attention_probs|None)."""
    B, T, H = x.shape
    Dh = H // num_heads
    NHd = num_heads * Dh

    # ---- wrapper-side weight fusion (layout plumbing, not compute hoisting) ----
    inv_sqrt_d = 1.0 / math.sqrt(Dh)

    def stack_w(w):                        # (NH, H, Dh) -> (H, NH*Dh)
        return jnp.transpose(w, (1, 0, 2)).reshape(H, NHd)

    def stack_b(b):                        # (NH, 1, Dh) -> (NH*Dh,)
        return b.reshape(NHd)

    # Fold 1/sqrt(Dh) into the Q columns so we never scale the (T,T) scores.
    w_qkv = jnp.concatenate(
        [stack_w(params["wq"]) * inv_sqrt_d,
         stack_w(params["wk"]),
         stack_w(params["wv"])], axis=1)                        # (H, 3*NHd)
    b_qkv = jnp.concatenate(
        [stack_b(params["bq"]) * inv_sqrt_d,
         stack_b(params["bk"]),
         stack_b(params["bv"])])[None, :]                       # (1, 3*NHd)

    wo = params["wo"]                                           # (NHd, H)
    bo = params["bo"]                                           # (1, H)

    kernel = functools.partial(_mha_kernel, num_heads=num_heads, head_size=Dh)

    out_shapes = [jax.ShapeDtypeStruct((B, T, H), jnp.float32)]
    out_specs = [pl.BlockSpec((1, T, H), lambda b: (b, 0, 0))]
    if output_attentions:
        out_shapes.append(jax.ShapeDtypeStruct((B, T, num_heads * T), jnp.float32))
        out_specs.append(pl.BlockSpec((1, T, num_heads * T), lambda b: (b, 0, 0)))

    results = pl.pallas_call(
        kernel,
        out_shape=tuple(out_shapes),
        grid_spec=pltpu.PrefetchScalarGridSpec(
            num_scalar_prefetch=0,
            grid=(B,),                                          # parallel (2 TCs on v7x)
            in_specs=[
                pl.BlockSpec((1, T, H), lambda b: (b, 0, 0)),           # x
                pl.BlockSpec((H, 3 * NHd), lambda b: (0, 0)),           # fused W_qkv
                pl.BlockSpec((1, 3 * NHd), lambda b: (0, 0)),           # fused b_qkv
                pl.BlockSpec((NHd, H), lambda b: (0, 0)),               # wo
                pl.BlockSpec((1, H), lambda b: (0, 0)),                 # bo
            ],
            out_specs=out_specs,
        ),
        compiler_params=pltpu.CompilerParams(
            dimension_semantics=("parallel",)),
    )(x, w_qkv, b_qkv, wo, bo)

    if output_attentions:
        out, probs_flat = results
        probs = probs_flat.reshape(B, T, num_heads, T).transpose(0, 2, 1, 3)
        return out, probs
    (out,) = results
    return out, None


def _reference(x, params, *, num_heads):
    """Pure-JAX reference mirroring the PyTorch module (eval mode)."""
    B, T, H = x.shape
    Dh = H // num_heads
    outs, probs_all = [], []
    for h in range(num_heads):
        q = x @ params["wq"][h] + params["bq"][h]
        k = x @ params["wk"][h] + params["bk"][h]
        v = x @ params["wv"][h] + params["bv"][h]
        scores = jnp.einsum("btd,bsd->bts", q, k) / math.sqrt(Dh)
        probs = jax.nn.softmax(scores, axis=-1)
        outs.append(jnp.einsum("bts,bsd->btd", probs, v))
        probs_all.append(probs)
    concat = jnp.concatenate(outs, axis=-1)
    y = concat @ params["wo"] + params["bo"]
    return y, jnp.stack(probs_all, axis=1)


if __name__ == "__main__":
    # config: hidden_size=32, num_attention_heads=4, qkv_bias=True, dropouts=0 (eval)
    B, T, H, num_heads = 2, 8, 32, 4
    Dh = H // num_heads
    all_head = num_heads * Dh

    key = jax.random.PRNGKey(0)
    keys = jax.random.split(key, 9)
    x = jax.random.normal(keys[0], (B, T, H), dtype=jnp.float32)

    scale = 0.1
    params = {
        "wq": scale * jax.random.normal(keys[1], (num_heads, H, Dh), jnp.float32),
        "bq": scale * jax.random.normal(keys[2], (num_heads, 1, Dh), jnp.float32),
        "wk": scale * jax.random.normal(keys[3], (num_heads, H, Dh), jnp.float32),
        "bk": scale * jax.random.normal(keys[4], (num_heads, 1, Dh), jnp.float32),
        "wv": scale * jax.random.normal(keys[5], (num_heads, H, Dh), jnp.float32),
        "bv": scale * jax.random.normal(keys[6], (num_heads, 1, Dh), jnp.float32),
        "wo": scale * jax.random.normal(keys[7], (all_head, H), jnp.float32),
        "bo": scale * jax.random.normal(keys[8], (1, H), jnp.float32),
    }

    # Path matching forward(..., output_attentions=True)
    out, probs = multi_head_attention(x, params, num_heads=num_heads,
                                      output_attentions=True)
    out = jax.block_until_ready(out)
    probs = jax.block_until_ready(probs)

    # Default path (output_attentions=False -> probs is None)
    out2, probs_none = multi_head_attention(x, params, num_heads=num_heads,
                                            output_attentions=False)
    out2 = jax.block_until_ready(out2)

    ref_out, ref_probs = _reference(x, params, num_heads=num_heads)
    assert out.shape == (B, T, H)
    assert probs.shape == (B, num_heads, T, T)
    assert probs_none is None
    assert jnp.allclose(out, ref_out, atol=1e-5, rtol=1e-5)
    assert jnp.allclose(out2, ref_out, atol=1e-5, rtol=1e-5)
    assert jnp.allclose(probs, ref_probs, atol=1e-5, rtol=1e-5)

    print("KERNEL_OK")
</pallas_src>

<mosaic_0001>
module attributes {stable_mosaic.version = 11 : i64} {
  func.func @_mha_kernel(%arg0: i32, %arg1: memref<1x8x32xf32, #tpu.memory_space<vmem>>, %arg2: memref<32x96xf32, #tpu.memory_space<vmem>>, %arg3: memref<1x96xf32, #tpu.memory_space<vmem>>, %arg4: memref<32x32xf32, #tpu.memory_space<vmem>>, %arg5: memref<1x32xf32, #tpu.memory_space<vmem>>, %arg6: memref<1x8x32xf32, #tpu.memory_space<vmem>>, %arg7: memref<1x8x32xf32, #tpu.memory_space<vmem>>) attributes {dimension_semantics = [#tpu.dimension_semantics<parallel>], iteration_bounds = array<i64: 2>, scalar_prefetch = 0 : i64, scratch_operands = 0 : i64, tpu.core_type = #tpu.core_type<tc>, window_params = [{transform_indices = @transform_0, window_bounds = array<i64: 1, 8, 32>}, {pipeline_mode = #tpu.pipeline_mode<synchronous>, transform_indices = @transform_1, window_bounds = array<i64: 32, 96>}, {pipeline_mode = #tpu.pipeline_mode<synchronous>, transform_indices = @transform_2, window_bounds = array<i64: 1, 96>}, {pipeline_mode = #tpu.pipeline_mode<synchronous>, transform_indices = @transform_3, window_bounds = array<i64: 32, 32>}, {pipeline_mode = #tpu.pipeline_mode<synchronous>, transform_indices = @transform_4, window_bounds = array<i64: 1, 32>}, {transform_indices = @transform_5, window_bounds = array<i64: 1, 8, 32>}, {transform_indices = @transform_6, window_bounds = array<i64: 1, 8, 32>}]} {
    %c0 = arith.constant 0 : index
    %c0_0 = arith.constant 0 : index
    %c0_1 = arith.constant 0 : index
    %0 = vector.load %arg1[%c0, %c0_0, %c0_1] : memref<1x8x32xf32, #tpu.memory_space<vmem>>, vector<1x8x32xf32>
    %1 = vector.shape_cast %0 : vector<1x8x32xf32> to vector<8x32xf32>
    %c0_2 = arith.constant 0 : index
    %c0_3 = arith.constant 0 : index
    %2 = vector.load %arg2[%c0_2, %c0_3] : memref<32x96xf32, #tpu.memory_space<vmem>>, vector<32x96xf32>
    %cst = arith.constant dense<0.000000e+00> : vector<8x96xf32>
    %3 = tpu.matmul %1, %2, %cst {dimension_numbers = #tpu.dot_dimension_numbers<[1], [0], [0], [1], [0, 0, 1, 1], [], []>} : vector<8x32xf32>, vector<32x96xf32>, vector<8x96xf32> -> vector<8x96xf32>
    %c0_4 = arith.constant 0 : index
    %c0_5 = arith.constant 0 : index
    %4 = vector.load %arg3[%c0_4, %c0_5] : memref<1x96xf32, #tpu.memory_space<vmem>>, vector<1x96xf32>
    %5 = vector.broadcast %4 : vector<1x96xf32> to vector<8x96xf32>
    %6 = arith.addf %3, %5 : vector<8x96xf32>
    %cst_6 = arith.constant 0.000000e+00 : f32
    %7 = vector.broadcast %cst_6 : f32 to vector<8x32xf32>
    %8 = vector.extract_strided_slice %6 {offsets = [0, 0], sizes = [8, 8], strides = [1, 1]} : vector<8x96xf32> to vector<8x8xf32>
    %9 = vector.extract_strided_slice %6 {offsets = [0, 32], sizes = [8, 8], strides = [1, 1]} : vector<8x96xf32> to vector<8x8xf32>
    %10 = vector.extract_strided_slice %6 {offsets = [0, 64], sizes = [8, 8], strides = [1, 1]} : vector<8x96xf32> to vector<8x8xf32>
    %cst_7 = arith.constant dense<0.000000e+00> : vector<8x8xf32>
    %11 = tpu.matmul %8, %9, %cst_7 {dimension_numbers = #tpu.dot_dimension_numbers<[1], [1], [0], [0], [0, 0, 1, 0], [], []>} : vector<8x8xf32>, vector<8x8xf32>, vector<8x8xf32> -> vector<8x8xf32>
    %cst_8 = arith.constant dense<0xFF800000> : vector<8xf32>
    %12 = vector.multi_reduction <maximumf>, %11, %cst_8 [1] : vector<8x8xf32> to vector<8xf32>
    %13 = vector.shape_cast %12 : vector<8xf32> to vector<8x1xf32>
    %14 = vector.broadcast %13 : vector<8x1xf32> to vector<8x8xf32>
    %15 = arith.subf %11, %14 : vector<8x8xf32>
    %16 = math.exp %15 : vector<8x8xf32>
    %cst_9 = arith.constant dense<0.000000e+00> : vector<8xf32>
    %17 = vector.multi_reduction <add>, %16, %cst_9 [1] : vector<8x8xf32> to vector<8xf32>
    %18 = vector.shape_cast %17 : vector<8xf32> to vector<8x1xf32>
    %19 = tpu.reciprocal %18 : vector<8x1xf32> -> vector<8x1xf32>
    %20 = vector.broadcast %19 : vector<8x1xf32> to vector<8x8xf32>
    %21 = arith.mulf %16, %20 : vector<8x8xf32>
    %c0_10 = arith.constant 0 : index
    %c0_11 = arith.constant 0 : index
    %c0_12 = arith.constant 0 : index
    %22 = vector.load %arg7[%c0_10, %c0_11, %c0_12] : memref<1x8x32xf32, #tpu.memory_space<vmem>>, vector<1x8x8xf32>
    %23 = vector.shape_cast %22 : vector<1x8x8xf32> to vector<8x8xf32>
    %24 = vector.shape_cast %21 : vector<8x8xf32> to vector<1x8x8xf32>
    tpu.vector_store %arg7[%c0_10, %c0_11, %c0_12], %24 {strides = array<i32>} : memref<1x8x32xf32, #tpu.memory_space<vmem>>, vector<1x8x8xf32>,
    %cst_13 = arith.constant dense<0.000000e+00> : vector<8x8xf32>
    %25 = tpu.matmul %21, %10, %cst_13 {dimension_numbers = #tpu.dot_dimension_numbers<[1], [0], [0], [1], [0, 0, 1, 1], [], []>} : vector<8x8xf32>, vector<8x8xf32>, vector<8x8xf32> -> vector<8x8xf32>
    %c0_14 = arith.constant 0 : index
    %c0_15 = arith.constant 0 : index
    %26 = vector.load %arg4[%c0_14, %c0_15] : memref<32x32xf32, #tpu.memory_space<vmem>>, vector<8x32xf32>
    %cst_16 = arith.constant dense<0.000000e+00> : vector<8x32xf32>
    %27 = tpu.matmul %25, %26, %cst_16 {dimension_numbers = #tpu.dot_dimension_numbers<[1], [0], [0], [1], [0, 0, 1, 1], [], []>} : vector<8x8xf32>, vector<8x32xf32>, vector<8x32xf32> -> vector<8x32xf32>
    %28 = arith.addf %7, %27 : vector<8x32xf32>
    %29 = vector.extract_strided_slice %6 {offsets = [0, 8], sizes = [8, 8], strides = [1, 1]} : vector<8x96xf32> to vector<8x8xf32>
    %30 = vector.extract_strided_slice %6 {offsets = [0, 40], sizes = [8, 8], strides = [1, 1]} : vector<8x96xf32> to vector<8x8xf32>
    %31 = vector.extract_strided_slice %6 {offsets = [0, 72], sizes = [8, 8], strides = [1, 1]} : vector<8x96xf32> to vector<8x8xf32>
    %cst_17 = arith.constant dense<0.000000e+00> : vector<8x8xf32>
    %32 = tpu.matmul %29, %30, %cst_17 {dimension_numbers = #tpu.dot_dimension_numbers<[1], [1], [0], [0], [0, 0, 1, 0], [], []>} : vector<8x8xf32>, vector<8x8xf32>, vector<8x8xf32> -> vector<8x8xf32>
    %cst_18 = arith.constant dense<0xFF800000> : vector<8xf32>
    %33 = vector.multi_reduction <maximumf>, %32, %cst_18 [1] : vector<8x8xf32> to vector<8xf32>
    %34 = vector.shape_cast %33 : vector<8xf32> to vector<8x1xf32>
    %35 = vector.broadcast %34 : vector<8x1xf32> to vector<8x8xf32>
    %36 = arith.subf %32, %35 : vector<8x8xf32>
    %37 = math.exp %36 : vector<8x8xf32>
    %cst_19 = arith.constant dense<0.000000e+00> : vector<8xf32>
    %38 = vector.multi_reduction <add>, %37, %cst_19 [1] : vector<8x8xf32> to vector<8xf32>
    %39 = vector.shape_cast %38 : vector<8xf32> to vector<8x1xf32>
    %40 = tpu.reciprocal %39 : vector<8x1xf32> -> vector<8x1xf32>
    %41 = vector.broadcast %40 : vector<8x1xf32> to vector<8x8xf32>
    %42 = arith.mulf %37, %41 : vector<8x8xf32>
    %c0_20 = arith.constant 0 : index
    %c0_21 = arith.constant 0 : index
    %c8 = arith.constant 8 : index
    %43 = vector.load %arg7[%c0_20, %c0_21, %c8] : memref<1x8x32xf32, #tpu.memory_space<vmem>>, vector<1x8x8xf32>
    %44 = vector.shape_cast %43 : vector<1x8x8xf32> to vector<8x8xf32>
    %45 = vector.shape_cast %42 : vector<8x8xf32> to vector<1x8x8xf32>
    tpu.vector_store %arg7[%c0_20, %c0_21, %c8], %45 {strides = array<i32>} : memref<1x8x32xf32, #tpu.memory_space<vmem>>, vector<1x8x8xf32>,
    %cst_22 = arith.constant dense<0.000000e+00> : vector<8x8xf32>
    %46 = tpu.matmul %42, %31, %cst_22 {dimension_numbers = #tpu.dot_dimension_numbers<[1], [0], [0], [1], [0, 0, 1, 1], [], []>} : vector<8x8xf32>, vector<8x8xf32>, vector<8x8xf32> -> vector<8x8xf32>
    %c8_23 = arith.constant 8 : index
    %c0_24 = arith.constant 0 : index
    %47 = vector.load %arg4[%c8_23, %c0_24] : memref<32x32xf32, #tpu.memory_space<vmem>>, vector<8x32xf32>
    %cst_25 = arith.constant dense<0.000000e+00> : vector<8x32xf32>
    %48 = tpu.matmul %46, %47, %cst_25 {dimension_numbers = #tpu.dot_dimension_numbers<[1], [0], [0], [1], [0, 0, 1, 1], [], []>} : vector<8x8xf32>, vector<8x32xf32>, vector<8x32xf32> -> vector<8x32xf32>
    %49 = arith.addf %28, %48 : vector<8x32xf32>
    %50 = vector.extract_strided_slice %6 {offsets = [0, 16], sizes = [8, 8], strides = [1, 1]} : vector<8x96xf32> to vector<8x8xf32>
    %51 = vector.extract_strided_slice %6 {offsets = [0, 48], sizes = [8, 8], strides = [1, 1]} : vector<8x96xf32> to vector<8x8xf32>
    %52 = vector.extract_strided_slice %6 {offsets = [0, 80], sizes = [8, 8], strides = [1, 1]} : vector<8x96xf32> to vector<8x8xf32>
    %cst_26 = arith.constant dense<0.000000e+00> : vector<8x8xf32>
    %53 = tpu.matmul %50, %51, %cst_26 {dimension_numbers = #tpu.dot_dimension_numbers<[1], [1], [0], [0], [0, 0, 1, 0], [], []>} : vector<8x8xf32>, vector<8x8xf32>, vector<8x8xf32> -> vector<8x8xf32>
    %cst_27 = arith.constant dense<0xFF800000> : vector<8xf32>
    %54 = vector.multi_reduction <maximumf>, %53, %cst_27 [1] : vector<8x8xf32> to vector<8xf32>
    %55 = vector.shape_cast %54 : vector<8xf32> to vector<8x1xf32>
    %56 = vector.broadcast %55 : vector<8x1xf32> to vector<8x8xf32>
    %57 = arith.subf %53, %56 : vector<8x8xf32>
    %58 = math.exp %57 : vector<8x8xf32>
    %cst_28 = arith.constant dense<0.000000e+00> : vector<8xf32>
    %59 = vector.multi_reduction <add>, %58, %cst_28 [1] : vector<8x8xf32> to vector<8xf32>
    %60 = vector.shape_cast %59 : vector<8xf32> to vector<8x1xf32>
    %61 = tpu.reciprocal %60 : vector<8x1xf32> -> vector<8x1xf32>
    %62 = vector.broadcast %61 : vector<8x1xf32> to vector<8x8xf32>
    %63 = arith.mulf %58, %62 : vector<8x8xf32>
    %c0_29 = arith.constant 0 : index
    %c0_30 = arith.constant 0 : index
    %c16 = arith.constant 16 : index
    %64 = vector.load %arg7[%c0_29, %c0_30, %c16] : memref<1x8x32xf32, #tpu.memory_space<vmem>>, vector<1x8x8xf32>
    %65 = vector.shape_cast %64 : vector<1x8x8xf32> to vector<8x8xf32>
    %66 = vector.shape_cast %63 : vector<8x8xf32> to vector<1x8x8xf32>
    tpu.vector_store %arg7[%c0_29, %c0_30, %c16], %66 {strides = array<i32>} : memref<1x8x32xf32, #tpu.memory_space<vmem>>, vector<1x8x8xf32>,
    %cst_31 = arith.constant dense<0.000000e+00> : vector<8x8xf32>
    %67 = tpu.matmul %63, %52, %cst_31 {dimension_numbers = #tpu.dot_dimension_numbers<[1], [0], [0], [1], [0, 0, 1, 1], [], []>} : vector<8x8xf32>, vector<8x8xf32>, vector<8x8xf32> -> vector<8x8xf32>
    %c16_32 = arith.constant 16 : index
    %c0_33 = arith.constant 0 : index
    %68 = vector.load %arg4[%c16_32, %c0_33] : memref<32x32xf32, #tpu.memory_space<vmem>>, vector<8x32xf32>
    %cst_34 = arith.constant dense<0.000000e+00> : vector<8x32xf32>
    %69 = tpu.matmul %67, %68, %cst_34 {dimension_numbers = #tpu.dot_dimension_numbers<[1], [0], [0], [1], [0, 0, 1, 1], [], []>} : vector<8x8xf32>, vector<8x32xf32>, vector<8x32xf32> -> vector<8x32xf32>
    %70 = arith.addf %49, %69 : vector<8x32xf32>
    %71 = vector.extract_strided_slice %6 {offsets = [0, 24], sizes = [8, 8], strides = [1, 1]} : vector<8x96xf32> to vector<8x8xf32>
    %72 = vector.extract_strided_slice %6 {offsets = [0, 56], sizes = [8, 8], strides = [1, 1]} : vector<8x96xf32> to vector<8x8xf32>
    %73 = vector.extract_strided_slice %6 {offsets = [0, 88], sizes = [8, 8], strides = [1, 1]} : vector<8x96xf32> to vector<8x8xf32>
    %cst_35 = arith.constant dense<0.000000e+00> : vector<8x8xf32>
    %74 = tpu.matmul %71, %72, %cst_35 {dimension_numbers = #tpu.dot_dimension_numbers<[1], [1], [0], [0], [0, 0, 1, 0], [], []>} : vector<8x8xf32>, vector<8x8xf32>, vector<8x8xf32> -> vector<8x8xf32>
    %cst_36 = arith.constant dense<0xFF800000> : vector<8xf32>
    %75 = vector.multi_reduction <maximumf>, %74, %cst_36 [1] : vector<8x8xf32> to vector<8xf32>
    %76 = vector.shape_cast %75 : vector<8xf32> to vector<8x1xf32>
    %77 = vector.broadcast %76 : vector<8x1xf32> to vector<8x8xf32>
    %78 = arith.subf %74, %77 : vector<8x8xf32>
    %79 = math.exp %78 : vector<8x8xf32>
    %cst_37 = arith.constant dense<0.000000e+00> : vector<8xf32>
    %80 = vector.multi_reduction <add>, %79, %cst_37 [1] : vector<8x8xf32> to vector<8xf32>
    %81 = vector.shape_cast %80 : vector<8xf32> to vector<8x1xf32>
    %82 = tpu.reciprocal %81 : vector<8x1xf32> -> vector<8x1xf32>
    %83 = vector.broadcast %82 : vector<8x1xf32> to vector<8x8xf32>
    %84 = arith.mulf %79, %83 : vector<8x8xf32>
    %c0_38 = arith.constant 0 : index
    %c0_39 = arith.constant 0 : index
    %c24 = arith.constant 24 : index
    %85 = vector.load %arg7[%c0_38, %c0_39, %c24] : memref<1x8x32xf32, #tpu.memory_space<vmem>>, vector<1x8x8xf32>
    %86 = vector.shape_cast %85 : vector<1x8x8xf32> to vector<8x8xf32>
    %87 = vector.shape_cast %84 : vector<8x8xf32> to vector<1x8x8xf32>
    tpu.vector_store %arg7[%c0_38, %c0_39, %c24], %87 {strides = array<i32>} : memref<1x8x32xf32, #tpu.memory_space<vmem>>, vector<1x8x8xf32>,
    %cst_40 = arith.constant dense<0.000000e+00> : vector<8x8xf32>
    %88 = tpu.matmul %84, %73, %cst_40 {dimension_numbers = #tpu.dot_dimension_numbers<[1], [0], [0], [1], [0, 0, 1, 1], [], []>} : vector<8x8xf32>, vector<8x8xf32>, vector<8x8xf32> -> vector<8x8xf32>
    %c24_41 = arith.constant 24 : index
    %c0_42 = arith.constant 0 : index
    %89 = vector.load %arg4[%c24_41, %c0_42] : memref<32x32xf32, #tpu.memory_space<vmem>>, vector<8x32xf32>
    %cst_43 = arith.constant dense<0.000000e+00> : vector<8x32xf32>
    %90 = tpu.matmul %88, %89, %cst_43 {dimension_numbers = #tpu.dot_dimension_numbers<[1], [0], [0], [1], [0, 0, 1, 1], [], []>} : vector<8x8xf32>, vector<8x32xf32>, vector<8x32xf32> -> vector<8x32xf32>
    %91 = arith.addf %70, %90 : vector<8x32xf32>
    %c0_44 = arith.constant 0 : index
    %c0_45 = arith.constant 0 : index
    %92 = vector.load %arg5[%c0_44, %c0_45] : memref<1x32xf32, #tpu.memory_space<vmem>>, vector<1x32xf32>
    %93 = vector.broadcast %92 : vector<1x32xf32> to vector<8x32xf32>
    %94 = arith.addf %91, %93 : vector<8x32xf32>
    %c0_46 = arith.constant 0 : index
    %c0_47 = arith.constant 0 : index
    %c0_48 = arith.constant 0 : index
    %95 = vector.load %arg6[%c0_46, %c0_47, %c0_48] : memref<1x8x32xf32, #tpu.memory_space<vmem>>, vector<1x8x32xf32>
    %96 = vector.shape_cast %95 : vector<1x8x32xf32> to vector<8x32xf32>
    %97 = vector.shape_cast %94 : vector<8x32xf32> to vector<1x8x32xf32>
    tpu.vector_store %arg6[%c0_46, %c0_47, %c0_48], %97 {strides = array<i32>} : memref<1x8x32xf32, #tpu.memory_space<vmem>>, vector<1x8x32xf32>,
    return
  }
  func.func @transform_0(%arg0: i32) -> (i32, i32, i32) {
    %c0_i32 = arith.constant 0 : i32
    %c0_i32_0 = arith.constant 0 : i32
    %c0_i32_1 = arith.constant 0 : i32
    return %arg0, %c0_i32, %c0_i32_0 : i32, i32, i32
  }
  func.func @transform_1(%arg0: i32) -> (i32, i32) {
    %c0_i32 = arith.constant 0 : i32
    %c0_i32_0 = arith.constant 0 : i32
    %c0_i32_1 = arith.constant 0 : i32
    return %c0_i32, %c0_i32_0 : i32, i32
  }
  func.func @transform_2(%arg0: i32) -> (i32, i32) {
    %c0_i32 = arith.constant 0 : i32
    %c0_i32_0 = arith.constant 0 : i32
    %c0_i32_1 = arith.constant 0 : i32
    return %c0_i32, %c0_i32_0 : i32, i32
  }
  func.func @transform_3(%arg0: i32) -> (i32, i32) {
    %c0_i32 = arith.constant 0 : i32
    %c0_i32_0 = arith.constant 0 : i32
    %c0_i32_1 = arith.constant 0 : i32
    return %c0_i32, %c0_i32_0 : i32, i32
  }
  func.func @transform_4(%arg0: i32) -> (i32, i32) {
    %c0_i32 = arith.constant 0 : i32
    %c0_i32_0 = arith.constant 0 : i32
    %c0_i32_1 = arith.constant 0 : i32
    return %c0_i32, %c0_i32_0 : i32, i32
  }
  func.func @transform_5(%arg0: i32) -> (i32, i32, i32) {
    %c0_i32 = arith.constant 0 : i32
    %c0_i32_0 = arith.constant 0 : i32
    %c0_i32_1 = arith.constant 0 : i32
    return %arg0, %c0_i32, %c0_i32_0 : i32, i32, i32
  }
  func.func @transform_6(%arg0: i32) -> (i32, i32, i32) {
    %c0_i32 = arith.constant 0 : i32
    %c0_i32_0 = arith.constant 0 : i32
    %c0_i32_1 = arith.constant 0 : i32
    return %arg0, %c0_i32, %c0_i32_0 : i32, i32, i32
  }
}

</mosaic_0001>

<llo_original>
// kernel: tpu_custom_call.1
$region0: #{tpu_custom_call.1}
  #allocation0 [shape = 'u32[]', space=smem, size = 0x4, offset = 0x4, fixed_abs, tag = 'smem constant byte address 0x4 - core index']
  #allocation1 [shape = 'u32[72,128]{1,0:T(1,128)}', space=vmem, size = 0x9000, scoped, tag = 'internal scratch']
  %s0 = inlined_call_operand.hbm [shape: f32[2,8,32], index: 0, kind: input, shape index: {}]
  %s1 = inlined_call_operand.hbm [shape: f32[32,96], index: 1, kind: input, shape index: {}]
  %s2 = inlined_call_operand.vmem [shape: f32[1,96], index: 2, kind: input, shape index: {}]
  %s3 = inlined_call_operand.hbm [shape: f32[32,32], index: 3, kind: input, shape index: {}]
  %s4 = inlined_call_operand.vmem [shape: f32[1,32], index: 4, kind: input, shape index: {}]
  %s5 = inlined_call_operand.hbm [shape: f32[2,8,32], index: 5, kind: output, shape index: {0}]
  %s6 = inlined_call_operand.hbm [shape: f32[2,8,32], index: 6, kind: output, shape index: {1}]
  %7 = xla_tuple %s5, %s6
  %s8 = sld [smem:[#allocation0]]
  $region73: #{tpu_custom_call.1} parent=0
    _
  %s10 = ssub.s32 1, %s8
  %s11 = scalar_select 0, %s10, %s8
  $region1: #{tpu_custom_call.1} parent=0
    #allocation2 [shape = 'u8[8192]{0}', space=vmem, size = 0x2000, scoped, tag = 'input window, operand 0']
    #allocation3 [shape = 's32[2]{0}', space=sflag, size = 0x8, scoped, tag = 'scoped memory for tpu_custom_call.1']
    #allocation4 [shape = 's32[2]{0}', space=sflag, size = 0x8, scoped, tag = 'scoped memory for tpu_custom_call.1']
    #allocation5 [shape = 'u8[16384]{0}', space=vmem, size = 0x4000, scoped, tag = 'input window, operand 1, single buffered']
    #allocation6 [shape = 's32[1]{0}', space=sflag, size = 0x4, scoped, tag = 'scoped memory for tpu_custom_call.1']
    #allocation7 [shape = 'u8[16384]{0}', space=vmem, size = 0x4000, scoped, tag = 'input window, operand 3, single buffered']
    #allocation8 [shape = 'u8[8192]{0}', space=vmem, size = 0x2000, scoped, tag = 'output window, operand 0']
    #allocation9 [shape = 'u8[8192]{0}', space=vmem, size = 0x2000, scoped, tag = 'output window, operand 1']
    #allocation10 [shape = 's32[2]{0}', space=sflag, size = 0x8, scoped, tag = 'scoped memory for tpu_custom_call.1']
    %12 = vsyncpa [#allocation3], 0
    %s13 = scalar_lea.sflag [#allocation3], 1
    %14 = vsyncpa %s13, 0
    %15 = vsyncpa [#allocation6], 0
    %16 = vsyncpa [#allocation4], 0
    %s17 = scalar_lea.sflag [#allocation4], 1
    %18 = vsyncpa %s17, 0
    %19 = vsyncpa [#allocation10], 0
    %s20 = scalar_lea.sflag [#allocation10], 1
    %21 = vsyncpa %s20, 0
    loop: start=0, step=1, limit=4
    $region2: #{tpu_custom_call.1} parent=1 // loop_pre_header
      _
    $region3: #{tpu_custom_call.1} parent=1 // loop_header
      %s23 = sphi 0, %s27
      %p24 = scmp.ge.s32.totalorder %s23, 4
      %s33 = sphi 0, %s35
      %s36 = sphi 0, %s33
      %s37 = sphi 0, %s36
      %s53 = sphi 0, %s37
      %s57 = sphi 0, %s57
      %s59 = sphi 0, %s57
      %s60 = sphi 0, %s59
      %s74 = sphi 0, %s60
      %s78 = sphi 0, %s78
      %s80 = sphi 0, %s78
      %s81 = sphi 0, %s80
      %s95 = sphi 0, %s81
      %s99 = sphi 0, %s99
      %s101 = sphi 0, %s99
      %s102 = sphi 0, %s101
      %s116 = sphi 0, %s102
      %s120 = sphi 0, %s120
      %s122 = sphi 0, %s120
      %s123 = sphi 0, %s122
      %s137 = sphi 0, %s123
      %s143 = sphi 0, %s145
      %s146 = sphi 0, %s143
      %s147 = sphi 0, %s146
      %s163 = sphi 0, %s147
      %s169 = sphi 0, %s171
      %s172 = sphi 0, %s169
      %s173 = sphi 0, %s172
      %s189 = sphi 0, %s173
    $region4: #{tpu_custom_call.1} parent=1 // loop_header_branch
      %26 = sbr.rel (%p24) target = $region8
    $region5: #{tpu_custom_call.1} parent=1 // loop_body
      %s28 = ssub.s32 %s23, 1
      %s29 = ssub.s32 %s23, 2
      %s30 = sadd.s32 %s23, 1
      %s31 = ssub.s32 %s23, %s30
      %p32 = scmp.eq.s32.totalorder %s31, 0
      %s34 = sadd.s32 %s33, 1
      %s35 = scalar_select %p32, %s33, %s34
      %p38 = pneg %p32
      %p39 = scmp.eq.s32.totalorder %s23, 1
      %p40 = por %p38, %p39
      %p41 = scmp.ne.s32.totalorder %s33, %s36
      %p42 = scmp.eq.s32.totalorder %s23, 0
      %p43 = por %p41, %p42
      %p44 = scmp.ne.s32.totalorder %s33, %s36
      %p45 = scmp.eq.s32.totalorder %s28, 1
      %p46 = por %p44, %p45
      %p47 = scmp.ne.s32.totalorder %s36, %s37
      %p48 = scmp.eq.s32.totalorder %s28, 0
      %p49 = por %p47, %p48
      %p50 = scmp.ne.s32.totalorder %s36, %s37
      %p51 = scmp.eq.s32.totalorder %s29, 1
      %p52 = por %p50, %p51
      %p54 = scmp.ne.s32.totalorder %s37, %s53
      %p55 = scmp.eq.s32.totalorder %s29, 0
      %p56 = por %p54, %p55
      %s58 = sadd.s32 %s57, 1
      %p61 = scmp.eq.s32.totalorder %s23, 1
      %p62 = scmp.ne.s32.totalorder %s57, %s59
      %p63 = scmp.eq.s32.totalorder %s23, 0
      %p64 = por %p62, %p63
      %p65 = scmp.ne.s32.totalorder %s57, %s59
      %p66 = scmp.eq.s32.totalorder %s28, 1
      %p67 = por %p65, %p66
      %p68 = scmp.ne.s32.totalorder %s59, %s60
      %p69 = scmp.eq.s32.totalorder %s28, 0
      %p70 = por %p68, %p69
      %p71 = scmp.ne.s32.totalorder %s59, %s60
      %p72 = scmp.eq.s32.totalorder %s29, 1
      %p73 = por %p71, %p72
      %p75 = scmp.ne.s32.totalorder %s60, %s74
      %p76 = scmp.eq.s32.totalorder %s29, 0
      %p77 = por %p75, %p76
      %s79 = sadd.s32 %s78, 1
      %p82 = scmp.eq.s32.totalorder %s23, 1
      %p83 = scmp.ne.s32.totalorder %s78, %s80
      %p84 = scmp.eq.s32.totalorder %s23, 0
      %p85 = por %p83, %p84
      %p86 = scmp.ne.s32.totalorder %s78, %s80
      %p87 = scmp.eq.s32.totalorder %s28, 1
      %p88 = por %p86, %p87
      %p89 = scmp.ne.s32.totalorder %s80, %s81
      %p90 = scmp.eq.s32.totalorder %s28, 0
      %p91 = por %p89, %p90
      %p92 = scmp.ne.s32.totalorder %s80, %s81
      %p93 = scmp.eq.s32.totalorder %s29, 1
      %p94 = por %p92, %p93
      %p96 = scmp.ne.s32.totalorder %s81, %s95
      %p97 = scmp.eq.s32.totalorder %s29, 0
      %p98 = por %p96, %p97
      %s100 = sadd.s32 %s99, 1
      %p103 = scmp.eq.s32.totalorder %s23, 1
      %p104 = scmp.ne.s32.totalorder %s99, %s101
      %p105 = scmp.eq.s32.totalorder %s23, 0
      %p106 = por %p104, %p105
      %p107 = scmp.ne.s32.totalorder %s99, %s101
      %p108 = scmp.eq.s32.totalorder %s28, 1
      %p109 = por %p107, %p108
      %p110 = scmp.ne.s32.totalorder %s101, %s102
      %p111 = scmp.eq.s32.totalorder %s28, 0
      %p112 = por %p110, %p111
      %p113 = scmp.ne.s32.totalorder %s101, %s102
      %p114 = scmp.eq.s32.totalorder %s29, 1
      %p115 = por %p113, %p114
      %p117 = scmp.ne.s32.totalorder %s102, %s116
      %p118 = scmp.eq.s32.totalorder %s29, 0
      %p119 = por %p117, %p118
      %s121 = sadd.s32 %s120, 1
      %p124 = scmp.eq.s32.totalorder %s23, 1
      %p125 = scmp.ne.s32.totalorder %s120, %s122
      %p126 = scmp.eq.s32.totalorder %s23, 0
      %p127 = por %p125, %p126
      %p128 = scmp.ne.s32.totalorder %s120, %s122
      %p129 = scmp.eq.s32.totalorder %s28, 1
      %p130 = por %p128, %p129
      %p131 = scmp.ne.s32.totalorder %s122, %s123
      %p132 = scmp.eq.s32.totalorder %s28, 0
      %p133 = por %p131, %p132
      %p134 = scmp.ne.s32.totalorder %s122, %s123
      %p135 = scmp.eq.s32.totalorder %s29, 1
      %p136 = por %p134, %p135
      %p138 = scmp.ne.s32.totalorder %s123, %s137
      %p139 = scmp.eq.s32.totalorder %s29, 0
      %p140 = por %p138, %p139
      %s141 = ssub.s32 %s23, %s30
      %p142 = scmp.eq.s32.totalorder %s141, 0
      %s144 = sadd.s32 %s143, 1
      %s145 = scalar_select %p142, %s143, %s144
      %p148 = pneg %p142
      %p149 = scmp.eq.s32.totalorder %s23, 1
      %p150 = por %p148, %p149
      %p151 = scmp.ne.s32.totalorder %s143, %s146
      %p152 = scmp.eq.s32.totalorder %s23, 0
      %p153 = por %p151, %p152
      %p154 = scmp.ne.s32.totalorder %s143, %s146
      %p155 = scmp.eq.s32.totalorder %s28, 1
      %p156 = por %p154, %p155
      %p157 = scmp.ne.s32.totalorder %s146, %s147
      %p158 = scmp.eq.s32.totalorder %s28, 0
      %p159 = por %p157, %p158
      %p160 = scmp.ne.s32.totalorder %s146, %s147
      %p161 = scmp.eq.s32.totalorder %s29, 1
      %p162 = por %p160, %p161
      %p164 = scmp.ne.s32.totalorder %s147, %s163
      %p165 = scmp.eq.s32.totalorder %s29, 0
      %p166 = por %p164, %p165
      %s167 = ssub.s32 %s23, %s30
      %p168 = scmp.eq.s32.totalorder %s167, 0
      %s170 = sadd.s32 %s169, 1
      %s171 = scalar_select %p168, %s169, %s170
      %p174 = pneg %p168
      %p175 = scmp.eq.s32.totalorder %s23, 1
      %p176 = por %p174, %p175
      %p177 = scmp.ne.s32.totalorder %s169, %s172
      %p178 = scmp.eq.s32.totalorder %s23, 0
      %p179 = por %p177, %p178
      %p180 = scmp.ne.s32.totalorder %s169, %s172
      %p181 = scmp.eq.s32.totalorder %s28, 1
      %p182 = por %p180, %p181
      %p183 = scmp.ne.s32.totalorder %s172, %s173
      %p184 = scmp.eq.s32.totalorder %s28, 0
      %p185 = por %p183, %p184
      %p186 = scmp.ne.s32.totalorder %s172, %s173
      %p187 = scmp.eq.s32.totalorder %s29, 1
      %p188 = por %p186, %p187
      %p190 = scmp.ne.s32.totalorder %s173, %s189
      %p191 = scmp.eq.s32.totalorder %s29, 0
      %p192 = por %p190, %p191
      %p193 = scmp.le.s32.totalorder 1, %s23
      %p194 = scmp.lt.s32.totalorder %s23, 3
      %p195 = pnand %p193, %p194
      %p196 = pneg %p195
      // Predicated region
      $region9: #{tpu_custom_call.1} parent=5 // pred_check
        _
      $region10: #{tpu_custom_call.1} parent=5 // pred_check_branch
        %198 = sbr.rel (%p195) target = $region12
      $region11: #{tpu_custom_call.1} parent=5 // pred_region
        %s199 = ssub.s32 %s23, 1
        // Predicated region
        $region13: #{tpu_custom_call.1} parent=11 // pred_check
          %p200 = pneg %p70
        $region14: #{tpu_custom_call.1} parent=11 // pred_check_branch
          %202 = sbr.rel (%p200) target = $region16
        $region15: #{tpu_custom_call.1} parent=11 // pred_region
          %204 = vsyncadd [#allocation6], 0
          %s205 = sshll.u32 %s1, 4
          %s206 = int_to_ptr.hbm [resolvable:$true] %s205
          %s207 = sshll.u32 [#allocation5], 4
          %s208 = int_to_ptr.vmem [resolvable:$true] %s207
          %213 = dma.hbm_to_vmem [thread:$0]  %s206, 512, %s208, [#allocation6], 128, 128, 8
        $region16: #{tpu_custom_call.1} parent=11 // pred_fallthru
          _
        // Predicated region
        $region17: #{tpu_custom_call.1} parent=11 // pred_check
          %p214 = pneg %p91
        $region18: #{tpu_custom_call.1} parent=11 // pred_check_branch
          %216 = sbr.rel (%p214) target = $region20
        $region19: #{tpu_custom_call.1} parent=11 // pred_region
          _
        $region20: #{tpu_custom_call.1} parent=11 // pred_fallthru
          _
        // Predicated region
        $region21: #{tpu_custom_call.1} parent=11 // pred_check
          %p217 = pneg %p112
        $region22: #{tpu_custom_call.1} parent=11 // pred_check_branch
          %219 = sbr.rel (%p217) target = $region24
        $region23: #{tpu_custom_call.1} parent=11 // pred_region
          %221 = vsyncadd [#allocation6], 0
          %s222 = sshll.u32 %s3, 4
          %s223 = int_to_ptr.hbm [resolvable:$true] %s222
          %s224 = sshll.u32 [#allocation7], 4
          %s225 = int_to_ptr.vmem [resolvable:$true] %s224
          %230 = dma.hbm_to_vmem [thread:$0]  %s223, 512, %s225, [#allocation6], 128, 128, 8
        $region24: #{tpu_custom_call.1} parent=11 // pred_fallthru
          _
        // Predicated region
        $region25: #{tpu_custom_call.1} parent=11 // pred_check
          %p231 = pneg %p133
        $region26: #{tpu_custom_call.1} parent=11 // pred_check_branch
          %233 = sbr.rel (%p231) target = $region28
        $region27: #{tpu_custom_call.1} parent=11 // pred_region
          _
        $region28: #{tpu_custom_call.1} parent=11 // pred_fallthru
          _
      $region12: #{tpu_custom_call.1} parent=5 // pred_fallthru
        _
      %p234 = scmp.lt.s32.totalorder %s23, 2
      // Predicated region
      $region29: #{tpu_custom_call.1} parent=5 // pred_check
        %p235 = pneg %p234
      $region30: #{tpu_custom_call.1} parent=5 // pred_check_branch
        %237 = sbr.rel (%p235) target = $region32
      $region31: #{tpu_custom_call.1} parent=5 // pred_region
        // Predicated region
        $region33: #{tpu_custom_call.1} parent=31 // pred_check
          %p238 = pneg %p43
        $region34: #{tpu_custom_call.1} parent=31 // pred_check_branch
          %240 = sbr.rel (%p238) target = $region36
        $region35: #{tpu_custom_call.1} parent=31 // pred_region
          %s241 = sand.u32 %s33, 1
          %s242 = scalar_lea.sflag [#allocation3], %s241
          %s243 = sand.u32 %s33, 1
          %s244 = smul.addr %s243, 8
          %s245 = scalar_lea.vmem [#allocation2], %s244
          %247 = vsyncadd %s242, 0
          %s248 = smul.addr %s23, 8
          %s249 = scalar_lea.hbm %s0, %s248
          %s251 = sshll.u32 %s249, 4
          %s252 = int_to_ptr.hbm [resolvable:$true] %s251
          %s253 = sshll.u32 %s245, 4
          %s254 = int_to_ptr.vmem [resolvable:$true] %s253
          %256 = dma.hbm_to_vmem [thread:$0]  %s252, 128, %s254, %s242
        $region36: #{tpu_custom_call.1} parent=31 // pred_fallthru
          _
      $region32: #{tpu_custom_call.1} parent=5 // pred_fallthru
        _
      %p257 = scmp.le.s32.totalorder 1, %s23
      %p258 = scmp.lt.s32.totalorder %s23, 3
      %p259 = pnand %p257, %p258
      %p260 = pneg %p259
      // Predicated region
      $region37: #{tpu_custom_call.1} parent=5 // pred_check
        _
      $region38: #{tpu_custom_call.1} parent=5 // pred_check_branch
        %262 = sbr.rel (%p259) target = $region40
      $region39: #{tpu_custom_call.1} parent=5 // pred_region
        %s263 = ssub.s32 %s23, 1
        %s264 = sand.u32 %s36, 1
        %s265 = scalar_lea.sflag [#allocation3], %s264
        %s266 = sand.u32 %s36, 1
        %s267 = smul.addr %s266, 8
        %s268 = scalar_lea.vmem [#allocation2], %s267
        // Predicated region
        $region41: #{tpu_custom_call.1} parent=39 // pred_check
          %p269 = pneg %p49
        $region42: #{tpu_custom_call.1} parent=39 // pred_check_branch
          %271 = sbr.rel (%p269) target = $region44
        $region43: #{tpu_custom_call.1} parent=39 // pred_region
          %273 = dma.done %s265, 128
        $region44: #{tpu_custom_call.1} parent=39 // pred_fallthru
          _
        // Predicated region
        $region45: #{tpu_custom_call.1} parent=39 // pred_check
          %p274 = pneg %p70
        $region46: #{tpu_custom_call.1} parent=39 // pred_check_branch
          %276 = sbr.rel (%p274) target = $region48
        $region47: #{tpu_custom_call.1} parent=39 // pred_region
          %278 = dma.done [#allocation6], 512
        $region48: #{tpu_custom_call.1} parent=39 // pred_fallthru
          _
        // Predicated region
        $region49: #{tpu_custom_call.1} parent=39 // pred_check
          %p279 = pneg %p112
        $region50: #{tpu_custom_call.1} parent=39 // pred_check_branch
          %281 = sbr.rel (%p279) target = $region52
        $region51: #{tpu_custom_call.1} parent=39 // pred_region
          %283 = dma.done [#allocation6], 512
        $region52: #{tpu_custom_call.1} parent=39 // pred_fallthru
          _
        %s284 = sand.u32 %s36, 1
        %s285 = scalar_lea.sflag [#allocation3], %s284
        %s286 = sand.u32 %s36, 1
        %s287 = smul.addr %s286, 8
        %s288 = scalar_lea.vmem [#allocation2], %s287
        %p289 = pneg %p49
        %p290 = pneg %p46
        %p291 = pneg %p70
        %p292 = pneg %p67
        %p293 = pneg %p91
        %p294 = pneg %p88
        %p295 = pneg %p112
        %p296 = pneg %p109
        %p297 = pneg %p133
        %p298 = pneg %p130
        %p299 = pneg %p159
        %p300 = pneg %p156
        %s301 = sand.u32 %s146, 1
        %s302 = scalar_lea.sflag [#allocation4], %s301
        %s303 = sand.u32 %s146, 1
        %s304 = smul.addr %s303, 8
        %s305 = scalar_lea.vmem [#allocation8], %s304
        %p306 = pneg %p185
        %p307 = pneg %p182
        %s308 = sand.u32 %s172, 1
        %s309 = scalar_lea.sflag [#allocation10], %s308
        %s310 = sand.u32 %s172, 1
        %s311 = smul.addr %s310, 8
        %s312 = scalar_lea.vmem [#allocation9], %s311
        %v313 = vld [vmem:[%s268] sm:$0xff]
        %v314 = vld [vmem:[#allocation5] sm:$0xff]
        %v315 = vld [vmem:[#allocation5 + $0x8] sm:$0xff]
        %v316 = vld [vmem:[#allocation5 + $0x10] sm:$0xff]
        %v317 = vld [vmem:[#allocation5 + $0x18] sm:$0xff]
        %v318 = vld [vmem:[%s2] sm:$0x1]
        %v320 = vperm.slane %v318, 0
        %vm322 = vcmask 261120
        %v324 = vsel %vm322, %v313, 0
        %326 = vmatpush.msra.mxu0 0.0
        %327 = vmatpush.msra.mxu0 0.0
        %328 = vmatpush.msra.mxu0 0.0
        %329 = vmatpush.msra.mxu0 0.0
        %330 = vmatpush.msra.mxu0 0.0
        %331 = vmatpush.msra.mxu0 0.0
        %332 = vmatpush.msra.mxu0 0.0
        %333 = vmatpush.msra.mxu0 0.0
        %334 = vmatpush.msra.mxu0 0.0
        %335 = vmatpush.msra.mxu0 0.0
        %336 = vmatpush.msra.mxu0 0.0
        %337 = vmatpush.msra.mxu0 0.0
        %338 = vmatpush.msra.mxu0 %v317
        %339 = vmatpush.msra.mxu0 %v316
        %340 = vmatpush.msra.mxu0 %v315
        %341 = vmatpush.msra.mxu0 %v314
        %342 = vmatmul.f32.gmra.mxu0 %v324
        %v343 = vpop.f32.mrf.mxu0
        %v344 = vadd.f32 %v320, %v343
        %345 = vdwg.mxu0
        %347 = vrot.lane.b32.xlu0 %v344, 96
        %v348 = vpop.permute.xlu0 %347
        %vm349 = vcmask 64512
        %v350 = vsel %vm349, %v344, 0
        %v352 = vsel %vm349, %v348, 0
        %354 = vmatpush.xpose.msra.mxu0 0.0
        %355 = vmatpush.xpose.msra.mxu0 0.0
        %356 = vmatpush.xpose.msra.mxu0 0.0
        %357 = vmatpush.xpose.msra.mxu0 0.0
        %358 = vmatpush.xpose.msra.mxu0 0.0
        %359 = vmatpush.xpose.msra.mxu0 0.0
        %360 = vmatpush.xpose.msra.mxu0 0.0
        %361 = vmatpush.xpose.msra.mxu0 0.0
        %362 = vmatpush.xpose.msra.mxu0 0.0
        %363 = vmatpush.xpose.msra.mxu0 0.0
        %364 = vmatpush.xpose.msra.mxu0 0.0
        %365 = vmatpush.xpose.msra.mxu0 0.0
        %366 = vmatpush.xpose.msra.mxu0 0.0
        %367 = vmatpush.xpose.msra.mxu0 0.0
        %368 = vmatpush.xpose.msra.mxu0 0.0
        %369 = vmatpush.xpose.msra.mxu0 %v352
        %370 = vmatmul.f32.gmra.mxu0 %v350
        %v371 = vpop.f32.mrf.mxu0
        %v372 = vadd.f32 0.0, %v371
        %373 = vdwg.mxu0
        %v374 = vsel %vm349, %v372, -inf
        %375 = vmax.xlane.f32.xlu0 %v374
        %v376 = vpop.xlane.xlu0 %375
        %v377 = vsub.f32 %v372, %v376
        %v378 = vmul.f32 %v377, 1.442695
        %v379 = vpow.pop %v378
        %v380 = vsel %vm349, %v379, 0.0
        %381 = vadd.xlane.f32.xlu0 %v380
        %v382 = vpop.xlane.xlu0 %381
        %v383 = vrcp.pop %v382
        %v384 = vmul.f32 %v382, %v383
        %v385 = vsub.f32 1.0, %v384
        %v386 = vmul.f32 %v383, %v385
        %v387 = vadd.f32 %v383, %v386
        %vm388 = vweird.f32 %v382
        %vm389 = vweird.f32 %v383
        %vm390 = vmor %vm388, %vm389
        %v391 = vsel %vm390, %v383, %v387
        %v392 = vand.u32 2147483647, %v382
        %vm393 = vcmp.eq.f32.partialorder %v392, 8.507059e+37
        %v394 = vand.u32 %v382, 2147483648
        %v395 = vor.u32 1.1754944e-38, %v394
        %v396 = vsel %vm393, %v395, %v391
        %v397 = vmul.f32 %v379, %v396
        %398 = vst.msk [vmem:[%s312] sm:$0xff] %vm349, %v397
        %399 = vrot.lane.b32.xlu0 %v344, 64
        %v400 = vpop.permute.xlu0 %399
        %v403 = vsel %vm349, %v397, 0
        %405 = vmatpush.msra.mxu0 0.0
        %406 = vmatpush.msra.mxu0 0.0
        %407 = vmatpush.msra.mxu0 0.0
        %408 = vmatpush.msra.mxu0 0.0
        %409 = vmatpush.msra.mxu0 0.0
        %410 = vmatpush.msra.mxu0 0.0
        %411 = vmatpush.msra.mxu0 0.0
        %412 = vmatpush.msra.mxu0 0.0
        %413 = vmatpush.msra.mxu0 0.0
        %414 = vmatpush.msra.mxu0 0.0
        %415 = vmatpush.msra.mxu0 0.0
        %416 = vmatpush.msra.mxu0 0.0
        %417 = vmatpush.msra.mxu0 0.0
        %418 = vmatpush.msra.mxu0 0.0
        %419 = vmatpush.msra.mxu0 0.0
        %420 = vmatpush.msra.mxu0 %v400
        %421 = vmatmul.f32.gmra.mxu0 %v403
        %v422 = vpop.f32.mrf.mxu0
        %v423 = vadd.f32 0.0, %v422
        %424 = vdwg.mxu0
        %v425 = vld [vmem:[#allocation7] sm:$0xff]
        %426 = vrot.lane.b32.xlu0 %v344, 120
        %v427 = vpop.permute.xlu0 %426
        %428 = vrot.lane.b32.xlu0 %v344, 88
        %v429 = vpop.permute.xlu0 %428
        %v430 = vsel %vm349, %v427, 0
        %v432 = vsel %vm349, %v429, 0
        %434 = vmatpush.xpose.msra.mxu0 0.0
        %435 = vmatpush.xpose.msra.mxu0 0.0
        %436 = vmatpush.xpose.msra.mxu0 0.0
        %437 = vmatpush.xpose.msra.mxu0 0.0
        %438 = vmatpush.xpose.msra.mxu0 0.0
        %439 = vmatpush.xpose.msra.mxu0 0.0
        %440 = vmatpush.xpose.msra.mxu0 0.0
        %441 = vmatpush.xpose.msra.mxu0 0.0
        %442 = vmatpush.xpose.msra.mxu0 0.0
        %443 = vmatpush.xpose.msra.mxu0 0.0
        %444 = vmatpush.xpose.msra.mxu0 0.0
        %445 = vmatpush.xpose.msra.mxu0 0.0
        %446 = vmatpush.xpose.msra.mxu0 0.0
        %447 = vmatpush.xpose.msra.mxu0 0.0
        %448 = vmatpush.xpose.msra.mxu0 0.0
        %449 = vmatpush.xpose.msra.mxu0 %v432
        %450 = vmatmul.f32.gmra.mxu0 %v430
        %v451 = vpop.f32.mrf.mxu0
        %v452 = vadd.f32 0.0, %v451
        %453 = vdwg.mxu0
        %v454 = vsel %vm349, %v452, -inf
        %455 = vmax.xlane.f32.xlu0 %v454
        %v456 = vpop.xlane.xlu0 %455
        %v457 = vsub.f32 %v452, %v456
        %v458 = vmul.f32 %v457, 1.442695
        %v459 = vpow.pop %v458
        %v460 = vsel %vm349, %v459, 0.0
        %461 = vadd.xlane.f32.xlu0 %v460
        %v462 = vpop.xlane.xlu0 %461
        %v463 = vrcp.pop %v462
        %v464 = vmul.f32 %v462, %v463
        %v465 = vsub.f32 1.0, %v464
        %v466 = vmul.f32 %v463, %v465
        %v467 = vadd.f32 %v463, %v466
        %vm468 = vweird.f32 %v462
        %vm469 = vweird.f32 %v463
        %vm470 = vmor %vm468, %vm469
        %v471 = vsel %vm470, %v463, %v467
        %v472 = vand.u32 2147483647, %v462
        %vm473 = vcmp.eq.f32.partialorder %v472, 8.507059e+37
        %v474 = vand.u32 %v462, 2147483648
        %v475 = vor.u32 1.1754944e-38, %v474
        %v476 = vsel %vm473, %v475, %v471
        %v477 = vmul.f32 %v459, %v476
        %479 = vrot.lane.b32.xlu0 %v477, 8
        %v480 = vpop.permute.xlu0 %479
        %vm482 = vcmask 130112
        %483 = vst.msk [vmem:[%s312] sm:$0xff] %vm482, %v480
        %484 = vrot.lane.b32.xlu0 %v344, 56
        %v485 = vpop.permute.xlu0 %484
        %v487 = vsel %vm349, %v477, 0
        %489 = vmatpush.msra.mxu0 0.0
        %490 = vmatpush.msra.mxu0 0.0
        %491 = vmatpush.msra.mxu0 0.0
        %492 = vmatpush.msra.mxu0 0.0
        %493 = vmatpush.msra.mxu0 0.0
        %494 = vmatpush.msra.mxu0 0.0
        %495 = vmatpush.msra.mxu0 0.0
        %496 = vmatpush.msra.mxu0 0.0
        %497 = vmatpush.msra.mxu0 0.0
        %498 = vmatpush.msra.mxu0 0.0
        %499 = vmatpush.msra.mxu0 0.0
        %500 = vmatpush.msra.mxu0 0.0
        %501 = vmatpush.msra.mxu0 0.0
        %502 = vmatpush.msra.mxu0 0.0
        %503 = vmatpush.msra.mxu0 0.0
        %504 = vmatpush.msra.mxu0 %v485
        %505 = vmatmul.f32.gmra.mxu0 %v487
        %v506 = vpop.f32.mrf.mxu0
        %v507 = vadd.f32 0.0, %v506
        %508 = vdwg.mxu0
        %v509 = vld [vmem:[#allocation7 + $0x8] sm:$0xff]
        %v511 = vsel %vm349, %v507, 0
        %513 = vmatpush.msra.mxu0 0.0
        %514 = vmatpush.msra.mxu0 0.0
        %515 = vmatpush.msra.mxu0 0.0
        %516 = vmatpush.msra.mxu0 0.0
        %517 = vmatpush.msra.mxu0 0.0
        %518 = vmatpush.msra.mxu0 0.0
        %519 = vmatpush.msra.mxu0 0.0
        %520 = vmatpush.msra.mxu0 0.0
        %521 = vmatpush.msra.mxu0 0.0
        %522 = vmatpush.msra.mxu0 0.0
        %523 = vmatpush.msra.mxu0 0.0
        %524 = vmatpush.msra.mxu0 0.0
        %525 = vmatpush.msra.mxu0 0.0
        %526 = vmatpush.msra.mxu0 0.0
        %527 = vmatpush.msra.mxu0 0.0
        %528 = vmatpush.msra.mxu0 %v509
        %529 = vmatmul.f32.gmra.mxu0 %v511
        %v530 = vpop.f32.mrf.mxu0
        %v531 = vadd.f32 0.0, %v530
        %532 = vdwg.mxu0
        %v534 = vsel %vm349, %v423, 0
        %536 = vmatpush.msra.mxu0 0.0
        %537 = vmatpush.msra.mxu0 0.0
        %538 = vmatpush.msra.mxu0 0.0
        %539 = vmatpush.msra.mxu0 0.0
        %540 = vmatpush.msra.mxu0 0.0
        %541 = vmatpush.msra.mxu0 0.0
        %542 = vmatpush.msra.mxu0 0.0
        %543 = vmatpush.msra.mxu0 0.0
        %544 = vmatpush.msra.mxu0 0.0
        %545 = vmatpush.msra.mxu0 0.0
        %546 = vmatpush.msra.mxu0 0.0
        %547 = vmatpush.msra.mxu0 0.0
        %548 = vmatpush.msra.mxu0 0.0
        %549 = vmatpush.msra.mxu0 0.0
        %550 = vmatpush.msra.mxu0 0.0
        %551 = vmatpush.msra.mxu0 %v425
        %552 = vmatmul.f32.gmra.mxu0 %v534
        %v553 = vpop.f32.mrf.mxu0
        %v554 = vadd.f32 %v531, %v553
        %555 = vdwg.mxu0
        %556 = vrot.lane.b32.xlu0 %v344, 112
        %v557 = vpop.permute.xlu0 %556
        %558 = vrot.lane.b32.xlu0 %v344, 80
        %v559 = vpop.permute.xlu0 %558
        %v560 = vsel %vm349, %v557, 0
        %v562 = vsel %vm349, %v559, 0
        %564 = vmatpush.xpose.msra.mxu0 0.0
        %565 = vmatpush.xpose.msra.mxu0 0.0
        %566 = vmatpush.xpose.msra.mxu0 0.0
        %567 = vmatpush.xpose.msra.mxu0 0.0
        %568 = vmatpush.xpose.msra.mxu0 0.0
        %569 = vmatpush.xpose.msra.mxu0 0.0
        %570 = vmatpush.xpose.msra.mxu0 0.0
        %571 = vmatpush.xpose.msra.mxu0 0.0
        %572 = vmatpush.xpose.msra.mxu0 0.0
        %573 = vmatpush.xpose.msra.mxu0 0.0
        %574 = vmatpush.xpose.msra.mxu0 0.0
        %575 = vmatpush.xpose.msra.mxu0 0.0
        %576 = vmatpush.xpose.msra.mxu0 0.0
        %577 = vmatpush.xpose.msra.mxu0 0.0
        %578 = vmatpush.xpose.msra.mxu0 0.0
        %579 = vmatpush.xpose.msra.mxu0 %v562
        %580 = vmatmul.f32.gmra.mxu0 %v560
        %v581 = vpop.f32.mrf.mxu0
        %v582 = vadd.f32 0.0, %v581
        %583 = vdwg.mxu0
        %v584 = vsel %vm349, %v582, -inf
        %585 = vmax.xlane.f32.xlu0 %v584
        %v586 = vpop.xlane.xlu0 %585
        %v587 = vsub.f32 %v582, %v586
        %v588 = vmul.f32 %v587, 1.442695
        %v589 = vpow.pop %v588
        %v590 = vsel %vm349, %v589, 0.0
        %591 = vadd.xlane.f32.xlu0 %v590
        %v592 = vpop.xlane.xlu0 %591
        %v593 = vrcp.pop %v592
        %v594 = vmul.f32 %v592, %v593
        %v595 = vsub.f32 1.0, %v594
        %v596 = vmul.f32 %v593, %v595
        %v597 = vadd.f32 %v593, %v596
        %vm598 = vweird.f32 %v592
        %vm599 = vweird.f32 %v593
        %vm600 = vmor %vm598, %vm599
        %v601 = vsel %vm600, %v593, %v597
        %v602 = vand.u32 2147483647, %v592
        %vm603 = vcmp.eq.f32.partialorder %v602, 8.507059e+37
        %v604 = vand.u32 %v592, 2147483648
        %v605 = vor.u32 1.1754944e-38, %v604
        %v606 = vsel %vm603, %v605, %v601
        %v607 = vmul.f32 %v589, %v606
        %609 = vrot.lane.b32.xlu0 %v607, 16
        %v610 = vpop.permute.xlu0 %609
        %vm612 = vcmask 195712
        %613 = vst.msk [vmem:[%s312] sm:$0xff] %vm612, %v610
        %614 = vrot.lane.b32.xlu0 %v344, 48
        %v615 = vpop.permute.xlu0 %614
        %v617 = vsel %vm349, %v607, 0
        %619 = vmatpush.msra.mxu0 0.0
        %620 = vmatpush.msra.mxu0 0.0
        %621 = vmatpush.msra.mxu0 0.0
        %622 = vmatpush.msra.mxu0 0.0
        %623 = vmatpush.msra.mxu0 0.0
        %624 = vmatpush.msra.mxu0 0.0
        %625 = vmatpush.msra.mxu0 0.0
        %626 = vmatpush.msra.mxu0 0.0
        %627 = vmatpush.msra.mxu0 0.0
        %628 = vmatpush.msra.mxu0 0.0
        %629 = vmatpush.msra.mxu0 0.0
        %630 = vmatpush.msra.mxu0 0.0
        %631 = vmatpush.msra.mxu0 0.0
        %632 = vmatpush.msra.mxu0 0.0
        %633 = vmatpush.msra.mxu0 0.0
        %634 = vmatpush.msra.mxu0 %v615
        %635 = vmatmul.f32.gmra.mxu0 %v617
        %v636 = vpop.f32.mrf.mxu0
        %v637 = vadd.f32 0.0, %v636
        %638 = vdwg.mxu0
        %v639 = vld [vmem:[#allocation7 + $0x10] sm:$0xff]
        %v641 = vsel %vm349, %v637, 0
        %643 = vmatpush.msra.mxu0 0.0
        %644 = vmatpush.msra.mxu0 0.0
        %645 = vmatpush.msra.mxu0 0.0
        %646 = vmatpush.msra.mxu0 0.0
        %647 = vmatpush.msra.mxu0 0.0
        %648 = vmatpush.msra.mxu0 0.0
        %649 = vmatpush.msra.mxu0 0.0
        %650 = vmatpush.msra.mxu0 0.0
        %651 = vmatpush.msra.mxu0 0.0
        %652 = vmatpush.msra.mxu0 0.0
        %653 = vmatpush.msra.mxu0 0.0
        %654 = vmatpush.msra.mxu0 0.0
        %655 = vmatpush.msra.mxu0 0.0
        %656 = vmatpush.msra.mxu0 0.0
        %657 = vmatpush.msra.mxu0 0.0
        %658 = vmatpush.msra.mxu0 %v639
        %659 = vmatmul.f32.gmra.mxu0 %v641
        %v660 = vpop.f32.mrf.mxu0
        %v661 = vadd.f32 0.0, %v660
        %662 = vdwg.mxu0
        %v663 = vadd.f32 %v554, %v661
        %664 = vrot.lane.b32.xlu0 %v344, 104
        %v665 = vpop.permute.xlu0 %664
        %666 = vrot.lane.b32.xlu0 %v344, 72
        %v667 = vpop.permute.xlu0 %666
        %v668 = vsel %vm349, %v665, 0
        %v670 = vsel %vm349, %v667, 0
        %672 = vmatpush.xpose.msra.mxu0 0.0
        %673 = vmatpush.xpose.msra.mxu0 0.0
        %674 = vmatpush.xpose.msra.mxu0 0.0
        %675 = vmatpush.xpose.msra.mxu0 0.0
        %676 = vmatpush.xpose.msra.mxu0 0.0
        %677 = vmatpush.xpose.msra.mxu0 0.0
        %678 = vmatpush.xpose.msra.mxu0 0.0
        %679 = vmatpush.xpose.msra.mxu0 0.0
        %680 = vmatpush.xpose.msra.mxu0 0.0
        %681 = vmatpush.xpose.msra.mxu0 0.0
        %682 = vmatpush.xpose.msra.mxu0 0.0
        %683 = vmatpush.xpose.msra.mxu0 0.0
        %684 = vmatpush.xpose.msra.mxu0 0.0
        %685 = vmatpush.xpose.msra.mxu0 0.0
        %686 = vmatpush.xpose.msra.mxu0 0.0
        %687 = vmatpush.xpose.msra.mxu0 %v670
        %688 = vmatmul.f32.gmra.mxu0 %v668
        %v689 = vpop.f32.mrf.mxu0
        %v690 = vadd.f32 0.0, %v689
        %691 = vdwg.mxu0
        %v692 = vsel %vm349, %v690, -inf
        %693 = vmax.xlane.f32.xlu0 %v692
        %v694 = vpop.xlane.xlu0 %693
        %v695 = vsub.f32 %v690, %v694
        %v696 = vmul.f32 %v695, 1.442695
        %v697 = vpow.pop %v696
        %v698 = vsel %vm349, %v697, 0.0
        %699 = vadd.xlane.f32.xlu0 %v698
        %v700 = vpop.xlane.xlu0 %699
        %v701 = vrcp.pop %v700
        %v702 = vmul.f32 %v700, %v701
        %v703 = vsub.f32 1.0, %v702
        %v704 = vmul.f32 %v701, %v703
        %v705 = vadd.f32 %v701, %v704
        %vm706 = vweird.f32 %v700
        %vm707 = vweird.f32 %v701
        %vm708 = vmor %vm706, %vm707
        %v709 = vsel %vm708, %v701, %v705
        %v710 = vand.u32 2147483647, %v700
        %vm711 = vcmp.eq.f32.partialorder %v710, 8.507059e+37
        %v712 = vand.u32 %v700, 2147483648
        %v713 = vor.u32 1.1754944e-38, %v712
        %v714 = vsel %vm711, %v713, %v709
        %v715 = vmul.f32 %v697, %v714
        %717 = vrot.lane.b32.xlu0 %v715, 24
        %v718 = vpop.permute.xlu0 %717
        %vm720 = vcmask 261312
        %721 = vst.msk [vmem:[%s312] sm:$0xff] %vm720, %v718
        %722 = vrot.lane.b32.xlu0 %v344, 40
        %v723 = vpop.permute.xlu0 %722
        %v725 = vsel %vm349, %v715, 0
        %727 = vmatpush.msra.mxu0 0.0
        %728 = vmatpush.msra.mxu0 0.0
        %729 = vmatpush.msra.mxu0 0.0
        %730 = vmatpush.msra.mxu0 0.0
        %731 = vmatpush.msra.mxu0 0.0
        %732 = vmatpush.msra.mxu0 0.0
        %733 = vmatpush.msra.mxu0 0.0
        %734 = vmatpush.msra.mxu0 0.0
        %735 = vmatpush.msra.mxu0 0.0
        %736 = vmatpush.msra.mxu0 0.0
        %737 = vmatpush.msra.mxu0 0.0
        %738 = vmatpush.msra.mxu0 0.0
        %739 = vmatpush.msra.mxu0 0.0
        %740 = vmatpush.msra.mxu0 0.0
        %741 = vmatpush.msra.mxu0 0.0
        %742 = vmatpush.msra.mxu0 %v723
        %743 = vmatmul.f32.gmra.mxu0 %v725
        %v744 = vpop.f32.mrf.mxu0
        %v745 = vadd.f32 0.0, %v744
        %746 = vdwg.mxu0
        %v747 = vld [vmem:[#allocation7 + $0x18] sm:$0xff]
        %v749 = vsel %vm349, %v745, 0
        %751 = vmatpush.msra.mxu0 0.0
        %752 = vmatpush.msra.mxu0 0.0
        %753 = vmatpush.msra.mxu0 0.0
        %754 = vmatpush.msra.mxu0 0.0
        %755 = vmatpush.msra.mxu0 0.0
        %756 = vmatpush.msra.mxu0 0.0
        %757 = vmatpush.msra.mxu0 0.0
        %758 = vmatpush.msra.mxu0 0.0
        %759 = vmatpush.msra.mxu0 0.0
        %760 = vmatpush.msra.mxu0 0.0
        %761 = vmatpush.msra.mxu0 0.0
        %762 = vmatpush.msra.mxu0 0.0
        %763 = vmatpush.msra.mxu0 0.0
        %764 = vmatpush.msra.mxu0 0.0
        %765 = vmatpush.msra.mxu0 0.0
        %766 = vmatpush.msra.mxu0 %v747
        %767 = vmatmul.f32.gmra.mxu0 %v749
        %v768 = vpop.f32.mrf.mxu0
        %v769 = vadd.f32 0.0, %v768
        %770 = vdwg.mxu0
        %v771 = vadd.f32 %v663, %v769
        %v772 = vld [vmem:[%s4] sm:$0x1]
        %v774 = vperm.slane %v772, 0
        %v776 = vadd.f32 %v771, %v774
        %777 = vst.msk [vmem:[%s305] sm:$0xff] %vm322, %v776
        %s778 = sand.u32 %s146, 1
        %s779 = scalar_lea.sflag [#allocation4], %s778
        %s780 = sand.u32 %s146, 1
        %s781 = smul.addr %s780, 8
        %s782 = scalar_lea.vmem [#allocation8], %s781
        %s783 = sand.u32 %s172, 1
        %s784 = scalar_lea.sflag [#allocation10], %s783
        %s785 = sand.u32 %s172, 1
        %s786 = smul.addr %s785, 8
        %s787 = scalar_lea.vmem [#allocation9], %s786
        // Predicated region
        $region53: #{tpu_custom_call.1} parent=39 // pred_check
          %p788 = pneg %p156
        $region54: #{tpu_custom_call.1} parent=39 // pred_check_branch
          %790 = sbr.rel (%p788) target = $region56
        $region55: #{tpu_custom_call.1} parent=39 // pred_region
          %792 = vsyncadd %s779, 0
          %s793 = smul.addr %s28, 8
          %s794 = scalar_lea.hbm %s5, %s793
          %s796 = sshll.u32 %s782, 4
          %s797 = int_to_ptr.vmem [resolvable:$true] %s796
          %s798 = sshll.u32 %s794, 4
          %s799 = int_to_ptr.hbm [resolvable:$true] %s798
          %801 = dma.vmem_to_hbm [thread:$0]  %s797, 128, %s799, %s779
        $region56: #{tpu_custom_call.1} parent=39 // pred_fallthru
          _
        // Predicated region
        $region57: #{tpu_custom_call.1} parent=39 // pred_check
          %p802 = pneg %p182
        $region58: #{tpu_custom_call.1} parent=39 // pred_check_branch
          %804 = sbr.rel (%p802) target = $region60
        $region59: #{tpu_custom_call.1} parent=39 // pred_region
          %806 = vsyncadd %s784, 0
          %s807 = smul.addr %s28, 8
          %s808 = scalar_lea.hbm %s6, %s807
          %s810 = sshll.u32 %s787, 4
          %s811 = int_to_ptr.vmem [resolvable:$true] %s810
          %s812 = sshll.u32 %s808, 4
          %s813 = int_to_ptr.hbm [resolvable:$true] %s812
          %815 = dma.vmem_to_hbm [thread:$0]  %s811, 128, %s813, %s784
        $region60: #{tpu_custom_call.1} parent=39 // pred_fallthru
          _
      $region40: #{tpu_custom_call.1} parent=5 // pred_fallthru
        _
      %p816 = scmp.le.s32.totalorder 2, %s23
      // Predicated region
      $region61: #{tpu_custom_call.1} parent=5 // pred_check
        %p817 = pneg %p816
      $region62: #{tpu_custom_call.1} parent=5 // pred_check_branch
        %819 = sbr.rel (%p817) target = $region64
      $region63: #{tpu_custom_call.1} parent=5 // pred_region
        %s820 = ssub.s32 %s23, 2
        // Predicated region
        $region65: #{tpu_custom_call.1} parent=63 // pred_check
          %p821 = pneg %p162
        $region66: #{tpu_custom_call.1} parent=63 // pred_check_branch
          %823 = sbr.rel (%p821) target = $region68
        $region67: #{tpu_custom_call.1} parent=63 // pred_region
          %s824 = sand.u32 %s147, 1
          %s825 = scalar_lea.sflag [#allocation4], %s824
          %s826 = sand.u32 %s147, 1
          %s827 = smul.addr %s826, 8
          %s828 = scalar_lea.vmem [#allocation8], %s827
          %830 = dma.done %s825, 128
        $region68: #{tpu_custom_call.1} parent=63 // pred_fallthru
          _
        // Predicated region
        $region69: #{tpu_custom_call.1} parent=63 // pred_check
          %p831 = pneg %p188
        $region70: #{tpu_custom_call.1} parent=63 // pred_check_branch
          %833 = sbr.rel (%p831) target = $region72
        $region71: #{tpu_custom_call.1} parent=63 // pred_region
          %s834 = sand.u32 %s173, 1
          %s835 = scalar_lea.sflag [#allocation10], %s834
          %s836 = sand.u32 %s173, 1
          %s837 = smul.addr %s836, 8
          %s838 = scalar_lea.vmem [#allocation9], %s837
          %840 = dma.done %s835, 128
        $region72: #{tpu_custom_call.1} parent=63 // pred_fallthru
          _
      $region64: #{tpu_custom_call.1} parent=5 // pred_fallthru
        _
    $region6: #{tpu_custom_call.1} parent=1 // loop_footer
      %s27 = sadd.s32 1, %s23
    $region7: #{tpu_custom_call.1} parent=1 // loop_footer_branch
      %22 = sbr.rel target = $region3
    $region8: #{tpu_custom_call.1} parent=1 // loop_exit
      _
    %841 = vsyncpa [#allocation3], 1
    %s842 = scalar_lea.sflag [#allocation3], 1
    %843 = vsyncpa %s842, 1
    %844 = vsyncpa [#allocation6], 1
    %845 = vsyncpa [#allocation4], 1
    %s846 = scalar_lea.sflag [#allocation4], 1
    %847 = vsyncpa %s846, 1
    %848 = vsyncpa [#allocation10], 1
    %s849 = scalar_lea.sflag [#allocation10], 1
    %850 = vsyncpa %s849, 1

</llo_original>
